<compile_context>
chip_gen: v7x
topology: tpu7x:2x2x1
jax: 0.10.0
libtpu: 0.0.40
codegen_flags: <defaults>
</compile_context>

<pallas_src>
import jax
import jax.numpy as jnp
from jax.experimental import pallas as pl
from jax.experimental.pallas import tpu as pltpu


def _round_up(x, m):
    return ((x + m - 1) // m) * m


def _normalize_kernel(img_ref, stats_ref, out_ref):
    # img_ref / out_ref : (BR, BL) tiles.
    # stats_ref         : (BR, 2) f32 columns: [:, 0] = mean, [:, 1] = 1/std.
    x = img_ref[...].astype(jnp.float32)
    stats = stats_ref[...]
    mean = stats[:, 0:1]        # (BR, 1) -> lane-broadcast
    inv_std = stats[:, 1:2]     # (BR, 1) -> lane-broadcast
    out_ref[...] = ((x - mean) * inv_std).astype(out_ref.dtype)


def normalization_forward(img, mean, std, *,
                          target_tile_bytes=8 * 1024 * 1024,
                          donate_input=False):
    """img: (N, C, H, W); mean, std: (C,). Returns (img - mean) / std (NCHW)."""
    N, C, H, W = img.shape
    NC, L = N * C, H * W
    itemsize = jnp.dtype(img.dtype).itemsize
    # Dtype-dependent sublane packing multiple: f32 -> 8, bf16/f16 -> 16, int8/fp8 -> 32.
    sublane = {1: 32, 2: 16}.get(itemsize, 8)

    # Free, contiguous 2D view: rows = (n, c) planes, lanes = H*W pixels.
    img2d = img.reshape(NC, L)

    # Fused per-row stats in f32: [mean, 1/std]; exact reciprocal on the host
    # (C scalar divides) keeps the kernel to a single fused multiply-add path.
    stats_c = jnp.stack(
        [mean.astype(jnp.float32), 1.0 / std.astype(jnp.float32)], axis=1)  # (C, 2)
    stats = jnp.tile(stats_c, (N, 1))                                       # (NC, 2)

    # ---- lane (last-dim) tiling --------------------------------------------
    # Keep the full (contiguous, lane-dense) H*W extent when a minimum-height
    # tile fits the budget; otherwise split into 128-multiple lane blocks
    # (pl.cdiv grid; only the trailing block pays masked stores).
    if L <= 128 or sublane * L * itemsize <= target_tile_bytes:
        block_lanes = L
    else:
        block_lanes = max(
            128, ((target_tile_bytes // (sublane * itemsize)) // 128) * 128)

    # ---- row (sublane) tiling ----------------------------------------------
    # Cap block_rows so the lane-padded (BR, 2)->(BR, 128) f32 stat buffers
    # stay small in VMEM (2048 rows -> ~1 MiB per buffer).
    ROW_CAP = 2048
    rows_target = max(sublane, target_tile_bytes // max(1, block_lanes * itemsize))
    rows_target = min(rows_target, ROW_CAP)
    if rows_target >= NC:
        block_rows = NC
    else:
        block_rows = max(sublane, (rows_target // sublane) * sublane)

    # ---- megacore: guarantee >= 2 grid programs for sizeable inputs ---------
    total_bytes = NC * L * itemsize
    if (pl.cdiv(NC, block_rows) * pl.cdiv(L, block_lanes) < 2
            and total_bytes > (2 << 20) and NC >= 2 * sublane):
        block_rows = max(sublane, ((NC // 2) // sublane) * sublane)

    grid = (pl.cdiv(NC, block_rows), pl.cdiv(L, block_lanes))

    # ---- VMEM budget (padding-aware) ----------------------------------------
    # Double-buffered input + output tiles, plus the 128-lane-padded f32 stat
    # buffers, plus headroom for Pallas internal scratch. Never set the scoped
    # limit below 32 MiB (safe on every generation's physical VMEM).
    padded_rows = _round_up(min(block_rows, NC), sublane)
    padded_lanes = _round_up(min(block_lanes, L), 128)
    tile_bytes = padded_rows * padded_lanes * itemsize
    stat_tile_bytes = _round_up(padded_rows, 8) * 128 * 4   # f32, lane-padded
    needed = 2 * (2 * tile_bytes) + 2 * stat_tile_bytes + (2 << 20)
    vmem_limit = int(max(needed, 32 << 20))

    out2d = pl.pallas_call(
        _normalize_kernel,
        out_shape=jax.ShapeDtypeStruct((NC, L), img.dtype),
        grid_spec=pltpu.PrefetchScalarGridSpec(
            num_scalar_prefetch=0,
            grid=grid,
            in_specs=[
                pl.BlockSpec((block_rows, block_lanes), lambda i, j: (i, j)),
                # Constant across j -> Pallas elides re-DMA of the stats
                # during the inner lane sweep. Do not reorder the grid.
                pl.BlockSpec((block_rows, 2), lambda i, j: (i, 0)),
            ],
            out_specs=pl.BlockSpec((block_rows, block_lanes), lambda i, j: (i, j)),
        ),
        compiler_params=pltpu.CompilerParams(
            dimension_semantics=("parallel", "parallel"),
            vmem_limit_bytes=vmem_limit,
        ),
        input_output_aliases=({0: 0} if donate_input else {}),
    )(img2d, stats)

    return out2d.reshape(N, C, H, W)


if __name__ == "__main__":
    key = jax.random.PRNGKey(0)
    k_img, k_mean, k_std = jax.random.split(key, 3)

    N, C, H, W = 2, 4, 16, 16
    img = jax.random.normal(k_img, (N, C, H, W), dtype=jnp.float32)
    # Deterministic per-channel "dataset statistics" (analogous to ImageNet mean/std).
    mean = jax.random.uniform(k_mean, (C,), dtype=jnp.float32, minval=0.2, maxval=0.8)
    std = jax.random.uniform(k_std, (C,), dtype=jnp.float32, minval=0.1, maxval=0.5)

    out = normalization_forward(img, mean, std)
    jax.block_until_ready(out)

    # Reference check against plain JAX broadcasting (matches PyTorch semantics).
    # Note: (x - m) * (1/s) is within ~1 ulp of (x - m) / s, not bit-identical.
    ref = (img - mean.reshape(-1, 1, 1)) / std.reshape(-1, 1, 1)
    assert jnp.allclose(out, ref, atol=1e-5, rtol=1e-5), "mismatch vs reference"

    print("KERNEL_OK")
</pallas_src>

<mosaic_0001>
module attributes {stable_mosaic.version = 11 : i64} {
  func.func @_normalize_kernel(%arg0: i32, %arg1: i32, %arg2: memref<8x256xf32, #tpu.memory_space<vmem>>, %arg3: memref<8x2xf32, #tpu.memory_space<vmem>>, %arg4: memref<8x256xf32, #tpu.memory_space<vmem>>) attributes {dimension_semantics = [#tpu.dimension_semantics<parallel>, #tpu.dimension_semantics<parallel>], iteration_bounds = array<i64: 1, 1>, scalar_prefetch = 0 : i64, scratch_operands = 0 : i64, tpu.core_type = #tpu.core_type<tc>, window_params = [{transform_indices = @transform_0, window_bounds = array<i64: 8, 256>}, {transform_indices = @transform_1, window_bounds = array<i64: 8, 2>}, {transform_indices = @transform_2, window_bounds = array<i64: 8, 256>}]} {
    %c0 = arith.constant 0 : index
    %c0_0 = arith.constant 0 : index
    %0 = vector.load %arg2[%c0, %c0_0] : memref<8x256xf32, #tpu.memory_space<vmem>>, vector<8x256xf32>
    %c0_1 = arith.constant 0 : index
    %c0_2 = arith.constant 0 : index
    %1 = vector.load %arg3[%c0_1, %c0_2] : memref<8x2xf32, #tpu.memory_space<vmem>>, vector<8x2xf32>
    %2 = vector.extract_strided_slice %1 {offsets = [0, 0], sizes = [8, 1], strides = [1, 1]} : vector<8x2xf32> to vector<8x1xf32>
    %3 = vector.extract_strided_slice %1 {offsets = [0, 1], sizes = [8, 1], strides = [1, 1]} : vector<8x2xf32> to vector<8x1xf32>
    %4 = vector.broadcast %2 : vector<8x1xf32> to vector<8x256xf32>
    %5 = arith.subf %0, %4 : vector<8x256xf32>
    %6 = vector.broadcast %3 : vector<8x1xf32> to vector<8x256xf32>
    %7 = arith.mulf %5, %6 : vector<8x256xf32>
    %c0_3 = arith.constant 0 : index
    %c0_4 = arith.constant 0 : index
    %8 = vector.load %arg4[%c0_3, %c0_4] : memref<8x256xf32, #tpu.memory_space<vmem>>, vector<8x256xf32>
    tpu.vector_store %arg4[%c0_3, %c0_4], %7 {strides = array<i32>} : memref<8x256xf32, #tpu.memory_space<vmem>>, vector<8x256xf32>,
    return
  }
  func.func @transform_0(%arg0: i32, %arg1: i32) -> (i32, i32) {
    %c0_i32 = arith.constant 0 : i32
    return %arg0, %arg1 : i32, i32
  }
  func.func @transform_1(%arg0: i32, %arg1: i32) -> (i32, i32) {
    %c0_i32 = arith.constant 0 : i32
    %c0_i32_0 = arith.constant 0 : i32
    return %arg0, %c0_i32 : i32, i32
  }
  func.func @transform_2(%arg0: i32, %arg1: i32) -> (i32, i32) {
    %c0_i32 = arith.constant 0 : i32
    return %arg0, %arg1 : i32, i32
  }
}

</mosaic_0001>

<llo_original>
// kernel: tpu_custom_call.1
$region0: #{tpu_custom_call.1}
  #allocation0 [shape = 'u32[]', space=smem, size = 0x4, offset = 0x4, fixed_abs, tag = 'smem constant byte address 0x4 - core index']
  #allocation1 [shape = 'u32[144,128]{1,0:T(1,128)}', space=vmem, size = 0x12000, scoped, tag = 'internal scratch']
  %s0 = inlined_call_operand.hbm [shape: f32[8,256], index: 0, kind: input, shape index: {}]
  %s1 = inlined_call_operand.vmem [shape: f32[8,2], index: 1, kind: input, shape index: {}]
  %s2 = inlined_call_operand.hbm [shape: f32[8,256], index: 2, kind: output, shape index: {}]
  %s3 = sld [smem:[#allocation0]]
  $region22: #{tpu_custom_call.1} parent=0
    _
  %s5 = ssub.s32 1, %s3
  %s6 = scalar_select 0, %s5, %s3
  $region1: #{tpu_custom_call.1} parent=0
    #allocation2 [shape = 'u8[8192]{0}', space=vmem, size = 0x2000, scoped, tag = 'input window, operand 0, single buffered']
    #allocation3 [shape = 's32[1]{0}', space=sflag, size = 0x4, scoped, tag = 'scoped memory for tpu_custom_call.1']
    #allocation4 [shape = 's32[1]{0}', space=sflag, size = 0x4, scoped, tag = 'scoped memory for tpu_custom_call.1']
    #allocation5 [shape = 'u8[8192]{0}', space=vmem, size = 0x2000, scoped, tag = 'output window, operand 0, single buffered']
    %7 = vsyncpa [#allocation3], 0
    %8 = vsyncpa [#allocation4], 0
    // Predicated region
    $region2: #{tpu_custom_call.1} parent=1 // pred_check
      _
    $region3: #{tpu_custom_call.1} parent=1 // pred_check_branch
      %10 = sbr.rel (0) target = $region5
    $region4: #{tpu_custom_call.1} parent=1 // pred_region
      %s12 = ssub.s32 256, 256
      %13 = vsyncadd [#allocation3], %s12
      %s15 = sshll.u32 [#allocation2], 4
      %s16 = int_to_ptr.vmem [resolvable:$true] %s15
      %18 = dma.hbm_to_vmem [thread:$0]  %s0, 256, %s16, [#allocation3]
    $region5: #{tpu_custom_call.1} parent=1 // pred_fallthru
      _
    // Predicated region
    $region6: #{tpu_custom_call.1} parent=1 // pred_check
      _
    $region7: #{tpu_custom_call.1} parent=1 // pred_check_branch
      %20 = sbr.rel (0) target = $region9
    $region8: #{tpu_custom_call.1} parent=1 // pred_region
      _
    $region9: #{tpu_custom_call.1} parent=1 // pred_fallthru
      _
    // Predicated region
    $region10: #{tpu_custom_call.1} parent=1 // pred_check
      _
    $region11: #{tpu_custom_call.1} parent=1 // pred_check_branch
      %22 = sbr.rel (0) target = $region13
    $region12: #{tpu_custom_call.1} parent=1 // pred_region
      %23 = dma.done [#allocation3], 256
    $region13: #{tpu_custom_call.1} parent=1 // pred_fallthru
      _
    %v24 = vld [vmem:[#allocation2] sm:$0xff]
    %v25 = vld [vmem:[#allocation2 + $0x8] sm:$0xff]
    %v26 = vld [vmem:[%s1] sm:$0xff]
    %28 = vset.pattern.permute.xlu0 0
    %29 = vperm.xlu0 %28, %v26
    %v30 = vpop.permute.xlu0 %29
    %v32 = vsub.f32 %v24, %v30
    %v33 = vsub.f32 %v25, %v30
    %34 = vset.pattern.permute.xlu0 1
    %35 = vperm.xlu0 %34, %v26
    %v36 = vpop.permute.xlu0 %35
    %v38 = vmul.f32 %v32, %v36
    %v39 = vmul.f32 %v33, %v36
    %40 = vst [vmem:[#allocation5] sm:$0xff] %v38
    %41 = vst [vmem:[#allocation5 + $0x8] sm:$0xff] %v39
    // Predicated region
    $region14: #{tpu_custom_call.1} parent=1 // pred_check
      _
    $region15: #{tpu_custom_call.1} parent=1 // pred_check_branch
      %43 = sbr.rel (0) target = $region17
    $region16: #{tpu_custom_call.1} parent=1 // pred_region
      %s45 = ssub.s32 256, 256
      %46 = vsyncadd [#allocation4], %s45
      %s48 = sshll.u32 [#allocation5], 4
      %s49 = int_to_ptr.vmem [resolvable:$true] %s48
      %51 = dma.vmem_to_hbm [thread:$0]  %s49, 256, %s2, [#allocation4]
    $region17: #{tpu_custom_call.1} parent=1 // pred_fallthru
      _
    // Predicated region
    $region18: #{tpu_custom_call.1} parent=1 // pred_check
      _
    $region19: #{tpu_custom_call.1} parent=1 // pred_check_branch
      %53 = sbr.rel (0) target = $region21
    $region20: #{tpu_custom_call.1} parent=1 // pred_region
      %54 = dma.done [#allocation4], 256
    $region21: #{tpu_custom_call.1} parent=1 // pred_fallthru
      _
    %55 = vsyncpa [#allocation3], 1
    %56 = vsyncpa [#allocation4], 1

</llo_original>
